<compile_context>
chip_gen: v7x
topology: tpu7x:2x2x1
jax: 0.10.0
libtpu: 0.0.40
codegen_flags: <defaults>
</compile_context>

<pallas_src>
import functools
import math

import jax
import jax.numpy as jnp
from jax.experimental import pallas as pl
from jax.experimental.pallas import tpu as pltpu

_VMEM_WORKSET_BUDGET = 24 * 1024 * 1024   # double-buffered x/out(/mask) tiles
_VMEM_LIMIT_BYTES = 32 * 1024 * 1024      # explicit scoped-VMEM limit (portable)


# ----------------------------- PE coefficients ----------------------------- #

def _make_pe(max_len, d_model, dtype=jnp.float32):
    """Reference sinusoidal table, identical math to the PyTorch __init__."""
    position = jnp.arange(0, max_len, dtype=jnp.float32)[:, None]          # (L,1)
    div_term = jnp.exp(
        jnp.arange(0, d_model, 2, dtype=jnp.float32) * (-math.log(10000.0) / d_model))
    pe = jnp.zeros((max_len, d_model), jnp.float32)
    pe = pe.at[:, 0::2].set(jnp.sin(position * div_term))
    pe = pe.at[:, 1::2].set(jnp.cos(position * div_term))
    return pe[:, None, :].astype(dtype)                                    # (L,1,D)


def _pe_rows(batch, d_model):
    """(1, B*D) freq/phase rows such that pe[s, b*D+d] = sin(s*freq + phase)."""
    d_idx = jnp.arange(d_model, dtype=jnp.int32)
    freq = jnp.exp(((d_idx // 2) * 2).astype(jnp.float32)
                   * (-math.log(10000.0) / d_model))                       # (D,)
    # even d -> sin(s*w);  odd d -> cos(s*w) = sin(s*w + pi/2)
    phase = jnp.where(d_idx % 2 == 0, 0.0, math.pi / 2.0).astype(jnp.float32)
    freq_row = jnp.tile(freq, (batch,))[None, :]                           # (1,B*D)
    phase_row = jnp.tile(phase, (batch,))[None, :]                         # (1,B*D)
    return freq_row, phase_row


# --------------------------------- kernels --------------------------------- #

def _pe_add_kernel(x_ref, freq_ref, phase_ref, o_ref, *, block_seq):
    ts, bd = x_ref.shape
    base = (pl.program_id(0) * block_seq).astype(jnp.float32)
    pos = base + jax.lax.broadcasted_iota(jnp.int32, (ts, bd), 0).astype(jnp.float32)
    pe = jnp.sin(pos * freq_ref[...] + phase_ref[...])                     # EUP
    o_ref[...] = (x_ref[...].astype(jnp.float32) + pe).astype(o_ref.dtype)


def _pe_add_dropout_kernel(x_ref, freq_ref, phase_ref, keep_ref, o_ref, *,
                           block_seq, scale):
    ts, bd = x_ref.shape
    base = (pl.program_id(0) * block_seq).astype(jnp.float32)
    pos = base + jax.lax.broadcasted_iota(jnp.int32, (ts, bd), 0).astype(jnp.float32)
    pe = jnp.sin(pos * freq_ref[...] + phase_ref[...])
    y = x_ref[...].astype(jnp.float32) + pe
    o_ref[...] = (y * (keep_ref[...].astype(jnp.float32) * scale)).astype(o_ref.dtype)


# --------------------------------- wrapper ---------------------------------- #

def _pick_block_seq(seq_len, row_bytes, n_row_streams):
    """Largest seq tile whose double-buffered working set fits the budget."""
    max_rows = _VMEM_WORKSET_BUDGET // max(1, 2 * n_row_streams * row_bytes)
    if seq_len <= max_rows:
        return seq_len
    return max(8, (max_rows // 8) * 8)


def positional_encoding(x, *, dropout_p=0.1, training=False, dropout_key=None,
                        max_len=1001, block_seq=None):
    """x: (S, B, D).  Returns dropout(x + pe[:S]) with the module's semantics."""
    S, B, D = x.shape
    assert S <= max_len, "sequence length exceeds max_len of the PE buffer"
    BD = B * D
    x2 = x.reshape(S, BD)                                   # lane-dense slab
    freq_row, phase_row = _pe_rows(B, D)

    use_dropout = bool(training) and dropout_p > 0.0
    itemsize = jnp.dtype(x.dtype).itemsize
    n_streams = 3 if use_dropout else 2                     # x, out (+ keep mask)
    if block_seq is None:
        block_seq = _pick_block_seq(S, BD * itemsize, n_streams)
    assert block_seq == S or block_seq % 8 == 0, \
        "block_seq must equal seq_len or be a multiple of 8"

    grid = (pl.cdiv(S, block_seq),)
    x_spec = pl.BlockSpec((block_seq, BD), lambda i: (i, 0))
    row_spec = pl.BlockSpec((1, BD), lambda i: (0, 0))      # tiny constant rows
    out_spec = pl.BlockSpec((block_seq, BD), lambda i: (i, 0))
    out_shape = jax.ShapeDtypeStruct((S, BD), x.dtype)
    cparams = pltpu.CompilerParams(
        dimension_semantics=("parallel",),
        vmem_limit_bytes=_VMEM_LIMIT_BYTES)

    if not use_dropout:
        kernel = functools.partial(_pe_add_kernel, block_seq=block_seq)
        y2 = pl.pallas_call(
            kernel,
            out_shape=out_shape,
            grid_spec=pltpu.PrefetchScalarGridSpec(
                num_scalar_prefetch=0,
                grid=grid,
                in_specs=[x_spec, row_spec, row_spec],
                out_specs=out_spec),
            compiler_params=cparams,
        )(x2, freq_row, phase_row)
        return y2.reshape(S, B, D)

    assert dropout_key is not None, "training-mode dropout needs a dropout_key"
    keep = jax.random.bernoulli(
        dropout_key, 1.0 - dropout_p, (S, BD)).astype(jnp.float32)
    kernel = functools.partial(_pe_add_dropout_kernel, block_seq=block_seq,
                               scale=1.0 / (1.0 - float(dropout_p)))
    y2 = pl.pallas_call(
        kernel,
        out_shape=out_shape,
        grid_spec=pltpu.PrefetchScalarGridSpec(
            num_scalar_prefetch=0,
            grid=grid,
            in_specs=[x_spec, row_spec, row_spec, x_spec],
            out_specs=out_spec),
        compiler_params=cparams,
    )(x2, freq_row, phase_row, keep)
    return y2.reshape(S, B, D)


# ----------------------------------- main ----------------------------------- #

if __name__ == "__main__":
    d_model = 32
    max_len = 1001
    seq, batch = 8, 2
    p = 0.1

    key = jax.random.PRNGKey(0)
    k_x, k_x2, k_drop = jax.random.split(key, 3)
    x = jax.random.normal(k_x, (seq, batch, d_model), dtype=jnp.float32)

    pe_table = _make_pe(max_len, d_model)           # reference "buffer"
    ref = x + pe_table[:seq]

    # eval mode (dropout = identity): matches x + pe[:S]
    y = jax.block_until_ready(positional_encoding(x, dropout_p=p, training=False))
    assert y.shape == x.shape and y.dtype == x.dtype
    assert jnp.allclose(y, ref, atol=1e-4), "eval-mode positional encoding mismatch"

    # multi-tile grid: exercises the per-tile position offset (program_id * block_seq)
    seq2 = 16
    x_big = jax.random.normal(k_x2, (seq2, batch, d_model), dtype=jnp.float32)
    ref_big = x_big + pe_table[:seq2]
    y_big = jax.block_until_ready(
        positional_encoding(x_big, training=False, block_seq=8))
    assert jnp.allclose(y_big, ref_big, atol=1e-4), "multi-tile mismatch"

    # training mode: bernoulli keep mask + 1/(1-p) scaling applied in-kernel
    y_tr = jax.block_until_ready(
        positional_encoding(x, dropout_p=p, training=True, dropout_key=k_drop))
    keep = jax.random.bernoulli(k_drop, 1.0 - p, (seq, batch * d_model)).astype(
        jnp.float32).reshape(seq, batch, d_model)
    ref_tr = ref * keep / (1.0 - p)
    assert jnp.allclose(y_tr, ref_tr, atol=1e-4), "training-mode dropout mismatch"

    print("KERNEL_OK")
</pallas_src>

<mosaic_0001>
module attributes {stable_mosaic.version = 11 : i64} {
  func.func @_pe_add_kernel(%arg0: i32, %arg1: memref<8x64xf32, #tpu.memory_space<vmem>>, %arg2: memref<1x64xf32, #tpu.memory_space<vmem>>, %arg3: memref<1x64xf32, #tpu.memory_space<vmem>>, %arg4: memref<8x64xf32, #tpu.memory_space<vmem>>) attributes {dimension_semantics = [#tpu.dimension_semantics<parallel>], iteration_bounds = array<i64: 1>, scalar_prefetch = 0 : i64, scratch_operands = 0 : i64, tpu.core_type = #tpu.core_type<tc>, window_params = [{transform_indices = @transform_0, window_bounds = array<i64: 8, 64>}, {pipeline_mode = #tpu.pipeline_mode<synchronous>, transform_indices = @transform_1, window_bounds = array<i64: 1, 64>}, {pipeline_mode = #tpu.pipeline_mode<synchronous>, transform_indices = @transform_2, window_bounds = array<i64: 1, 64>}, {transform_indices = @transform_3, window_bounds = array<i64: 8, 64>}]} {
    %c8_i32 = arith.constant 8 : i32
    %0 = arith.muli %arg0, %c8_i32 : i32
    %1 = arith.sitofp %0 : i32 to f32
    %2 = tpu.iota {dimensions = array<i32: 0>} : vector<8x64xi32>
    %3 = arith.sitofp %2 : vector<8x64xi32> to vector<8x64xf32>
    %4 = vector.broadcast %1 : f32 to vector<8x64xf32>
    %5 = arith.addf %4, %3 : vector<8x64xf32>
    %c0 = arith.constant 0 : index
    %c0_0 = arith.constant 0 : index
    %6 = vector.load %arg2[%c0, %c0_0] : memref<1x64xf32, #tpu.memory_space<vmem>>, vector<1x64xf32>
    %7 = vector.broadcast %6 : vector<1x64xf32> to vector<8x64xf32>
    %8 = arith.mulf %5, %7 : vector<8x64xf32>
    %c0_1 = arith.constant 0 : index
    %c0_2 = arith.constant 0 : index
    %9 = vector.load %arg3[%c0_1, %c0_2] : memref<1x64xf32, #tpu.memory_space<vmem>>, vector<1x64xf32>
    %10 = vector.broadcast %9 : vector<1x64xf32> to vector<8x64xf32>
    %11 = arith.addf %8, %10 : vector<8x64xf32>
    %12 = math.sin %11 : vector<8x64xf32>
    %c0_3 = arith.constant 0 : index
    %c0_4 = arith.constant 0 : index
    %13 = vector.load %arg1[%c0_3, %c0_4] : memref<8x64xf32, #tpu.memory_space<vmem>>, vector<8x64xf32>
    %14 = arith.addf %13, %12 : vector<8x64xf32>
    %c0_5 = arith.constant 0 : index
    %c0_6 = arith.constant 0 : index
    %15 = vector.load %arg4[%c0_5, %c0_6] : memref<8x64xf32, #tpu.memory_space<vmem>>, vector<8x64xf32>
    tpu.vector_store %arg4[%c0_5, %c0_6], %14 {strides = array<i32>} : memref<8x64xf32, #tpu.memory_space<vmem>>, vector<8x64xf32>,
    return
  }
  func.func @transform_0(%arg0: i32) -> (i32, i32) {
    %c0_i32 = arith.constant 0 : i32
    %c0_i32_0 = arith.constant 0 : i32
    return %arg0, %c0_i32 : i32, i32
  }
  func.func @transform_1(%arg0: i32) -> (i32, i32) {
    %c0_i32 = arith.constant 0 : i32
    %c0_i32_0 = arith.constant 0 : i32
    %c0_i32_1 = arith.constant 0 : i32
    return %c0_i32, %c0_i32_0 : i32, i32
  }
  func.func @transform_2(%arg0: i32) -> (i32, i32) {
    %c0_i32 = arith.constant 0 : i32
    %c0_i32_0 = arith.constant 0 : i32
    %c0_i32_1 = arith.constant 0 : i32
    return %c0_i32, %c0_i32_0 : i32, i32
  }
  func.func @transform_3(%arg0: i32) -> (i32, i32) {
    %c0_i32 = arith.constant 0 : i32
    %c0_i32_0 = arith.constant 0 : i32
    return %arg0, %c0_i32 : i32, i32
  }
}

</mosaic_0001>

<llo_original>
// kernel: tpu_custom_call.1
$region0: #{tpu_custom_call.1}
  #allocation0 [shape = 'u32[]', space=smem, size = 0x4, offset = 0x4, fixed_abs, tag = 'smem constant byte address 0x4 - core index']
  #allocation1 [shape = 'u32[144,128]{1,0:T(1,128)}', space=vmem, size = 0x12000, scoped, tag = 'internal scratch']
  %s0 = inlined_call_operand.hbm [shape: f32[8,64], index: 0, kind: input, shape index: {}]
  %s1 = inlined_call_operand.vmem [shape: f32[1,64], index: 1, kind: input, shape index: {}]
  %s2 = inlined_call_operand.vmem [shape: f32[1,64], index: 2, kind: input, shape index: {}]
  %s3 = inlined_call_operand.hbm [shape: f32[8,64], index: 3, kind: output, shape index: {}]
  %s4 = sld [smem:[#allocation0]]
  $region26: #{tpu_custom_call.1} parent=0
    _
  %s6 = ssub.s32 1, %s4
  %s7 = scalar_select 0, %s6, %s4
  $region1: #{tpu_custom_call.1} parent=0
    #allocation2 [shape = 'u8[4096]{0}', space=vmem, size = 0x1000, scoped, tag = 'input window, operand 0, single buffered']
    #allocation3 [shape = 's32[1]{0}', space=sflag, size = 0x4, scoped, tag = 'scoped memory for tpu_custom_call.1']
    #allocation4 [shape = 's32[1]{0}', space=sflag, size = 0x4, scoped, tag = 'scoped memory for tpu_custom_call.1']
    #allocation5 [shape = 'u8[4096]{0}', space=vmem, size = 0x1000, scoped, tag = 'output window, operand 0, single buffered']
    %8 = vsyncpa [#allocation3], 0
    %9 = vsyncpa [#allocation4], 0
    // Predicated region
    $region2: #{tpu_custom_call.1} parent=1 // pred_check
      _
    $region3: #{tpu_custom_call.1} parent=1 // pred_check_branch
      %11 = sbr.rel (0) target = $region5
    $region4: #{tpu_custom_call.1} parent=1 // pred_region
      %s13 = ssub.s32 128, 128
      %14 = vsyncadd [#allocation3], %s13
      %s16 = sshll.u32 [#allocation2], 4
      %s17 = int_to_ptr.vmem [resolvable:$true] %s16
      %19 = dma.hbm_to_vmem [thread:$0]  %s0, 128, %s17, [#allocation3]
    $region5: #{tpu_custom_call.1} parent=1 // pred_fallthru
      _
    // Predicated region
    $region6: #{tpu_custom_call.1} parent=1 // pred_check
      _
    $region7: #{tpu_custom_call.1} parent=1 // pred_check_branch
      %21 = sbr.rel (0) target = $region9
    $region8: #{tpu_custom_call.1} parent=1 // pred_region
      _
    $region9: #{tpu_custom_call.1} parent=1 // pred_fallthru
      _
    // Predicated region
    $region10: #{tpu_custom_call.1} parent=1 // pred_check
      _
    $region11: #{tpu_custom_call.1} parent=1 // pred_check_branch
      %23 = sbr.rel (0) target = $region13
    $region12: #{tpu_custom_call.1} parent=1 // pred_region
      _
    $region13: #{tpu_custom_call.1} parent=1 // pred_fallthru
      _
    // Predicated region
    $region14: #{tpu_custom_call.1} parent=1 // pred_check
      _
    $region15: #{tpu_custom_call.1} parent=1 // pred_check_branch
      %25 = sbr.rel (0) target = $region17
    $region16: #{tpu_custom_call.1} parent=1 // pred_region
      %26 = dma.done [#allocation3], 128
    $region17: #{tpu_custom_call.1} parent=1 // pred_fallthru
      _
    %s27 = smul.u32 0, 8
    %s28 = scvt.s32.f32 %s27
    %v29 = vlaneseq
    %v30 = vshrl.u32 %v29, 7
    %v31 = vcvt.s32.f32 %v30
    %v32 = vstv %s28
    %v33 = vadd.f32 %v32, %v31
    %v34 = vld [vmem:[%s1] sm:$0x1]
    %v36 = vlaneseq
    %v37 = vshrl.u32 %v36, 7
    %v38 = vsub.s32 0, %v37
    %v39 = vrot.slane %v34, %v38
    %v41 = vmul.f32 %v33, %v39
    %v42 = vld [vmem:[%s2] sm:$0x1]
    %v44 = vlaneseq
    %v45 = vshrl.u32 %v44, 7
    %v46 = vsub.s32 0, %v45
    %v47 = vrot.slane %v42, %v46
    %v49 = vadd.f32 %v41, %v47
    %v50 = vand.u32 2147483647, %v49
    %vm51 = vcmp.le.f32.partialorder %v50, 0.7853982
    %vm52 = vcmp.lt.s32.totalorder %v49, 0
    %v53 = vand.u32 %v49, 2139095040
    %v54 = vshrl.u32 %v53, 23
    %v55 = vsub.s32 %v54, 127
    %v56 = vand.u32 2147483647, %v49
    %v57 = vand.u32 %v56, 8388607
    %v58 = vor.u32 %v57, 8388608
    %v59 = vsub.s32 0, %v58
    %v60 = vadd.s32 %v55, 1
    %vm61 = vcmp.gt.s32.totalorder %v60, 0
    %v62 = vsel %vm61, %v60, 0
    %v63 = vshrl.u32 %v62, 5
    %v64 = vand.u32 %v62, 31
    %v65 = vsub.s32 32, %v64
    %v66 = vshrl.u32 683565275, %v65
    %v67 = vshll.u32 683565275, %v64
    %v68 = vshrl.u32 2475754826, %v65
    %v69 = vor.u32 %v67, %v68
    %v70 = vshll.u32 2475754826, %v64
    %v71 = vshrl.u32 2131351028, %v65
    %v72 = vor.u32 %v70, %v71
    %v73 = vshll.u32 2131351028, %v64
    %v74 = vshrl.u32 2102212464, %v65
    %v75 = vor.u32 %v73, %v74
    %v76 = vshll.u32 2102212464, %v64
    %v77 = vshrl.u32 920167782, %v65
    %v78 = vor.u32 %v76, %v77
    %v79 = vshll.u32 920167782, %v64
    %v80 = vshrl.u32 1326507024, %v65
    %v81 = vor.u32 %v79, %v80
    %vm82 = vcmp.lt.s32.totalorder %v63, 1
    %vm83 = vcmp.lt.s32.totalorder %v63, 2
    %vm84 = vcmp.lt.s32.totalorder %v63, 3
    %vm85 = vcmp.lt.s32.totalorder %v63, 4
    %v86 = vsel %vm82, %v66, %v69
    %v87 = vsel %vm85, %v75, 2102212464
    %v88 = vsel %vm84, %v72, %v87
    %v89 = vsel %vm83, %v86, %v88
    %v90 = vsel %vm82, %v69, %v72
    %v91 = vsel %vm85, %v78, 920167782
    %v92 = vsel %vm84, %v75, %v91
    %v93 = vsel %vm83, %v90, %v92
    %v94 = vsel %vm82, %v72, %v75
    %v95 = vsel %vm85, %v81, 1326507024
    %v96 = vsel %vm84, %v78, %v95
    %v97 = vsel %vm83, %v94, %v96
    %v98 = vshll.u32 %v58, 8
    %v99 = vmul.u32.u64.compose %v98, %v97
    %v100 = vextract.low.u32 %v99
    %v101 = vextract.high.u32 %v99
    %v102 = vmul.u32.u64.compose %v98, %v93
    %v103 = vextract.low.u32 %v102
    %v104 = vextract.high.u32 %v102
    %v105 = vmul.u32 %v98, %v89
    %v106 = vadd.s32 %v101, %v103
    %vm107 = vc.u32 %v101, %v103
    %v108 = vadd.s32 %v104, 1
    %v109 = vsel %vm107, %v108, %v104
    %v110 = vadd.s32 %v105, %v109
    %v111 = vadd.s32 %v110, 536870912
    %v112 = vshrl.u32 %v111, 30
    %v113 = vshll.u32 %v112, 30
    %v114 = vsub.s32 %v110, %v113
    %vm115 = vcmp.lt.s32.totalorder %v114, 0
    %v116 = vsub.s32 0, %v114
    %v117 = vsel %vm115, %v116, %v114
    %v118 = vclz %v117
    %v119 = vsub.s32 %v118, 2
    %vm120 = vcmp.gt.s32.totalorder 0, %v119
    %v121 = vsel %vm120, 0, %v119
    %v122 = vsub.s32 32, %v121
    %v123 = vshll.u32 %v114, %v121
    %v124 = vshrl.u32 %v106, %v122
    %v125 = vor.u32 %v123, %v124
    %v126 = vsub.s32 4294967266, %v121
    %v127 = vadd.s32 %v126, 127
    %v128 = vshll.u32 %v127, 23
    %v129 = vor.u32 4788187, %v128
    %v130 = vand.u32 2147483647, %v129
    %v132 = vcvt.s32.f32 %v125
    %v133 = vmul.f32 %v132, %v130
    %v134 = vxor.u32 %v133, 2147483648
    %v135 = vsel %vm52, %v134, %v133
    %v136 = vsub.s32 4, %v112
    %v137 = vsel %vm52, %v136, %v112
    %v138 = vsel %vm51, %v49, %v135
    %v139 = vsel %vm51, 0, %v137
    %v140 = vcosq.f32.pop %v138
    %v141 = vsinq.f32.pop %v138
    %vm142 = vweird.f32 %v49
    %v143 = vadd.s32 %v139, 3
    %v144 = vand.u32 %v143, 3
    %vm145 = vcmp.lt.s32.totalorder %v144, 2
    %vm146 = vcmp.eq.s32.totalorder %v144, 0
    %v147 = vxor.u32 %v141, 2147483648
    %v148 = vsel %vm146, %v140, %v147
    %vm149 = vcmp.eq.s32.totalorder %v144, 2
    %v150 = vxor.u32 %v140, 2147483648
    %v151 = vsel %vm149, %v150, %v141
    %v152 = vsel %vm145, %v148, %v151
    %v153 = vsel %vm142, nan, %v152
    %v154 = vld [vmem:[#allocation2] sm:$0xff]
    %v155 = vadd.f32 %v154, %v153
    %vm156 = vcmask 523264
    %157 = vst.msk [vmem:[#allocation5] sm:$0xff] %vm156, %v155
    // Predicated region
    $region18: #{tpu_custom_call.1} parent=1 // pred_check
      _
    $region19: #{tpu_custom_call.1} parent=1 // pred_check_branch
      %159 = sbr.rel (0) target = $region21
    $region20: #{tpu_custom_call.1} parent=1 // pred_region
      %s161 = ssub.s32 128, 128
      %162 = vsyncadd [#allocation4], %s161
      %s164 = sshll.u32 [#allocation5], 4
      %s165 = int_to_ptr.vmem [resolvable:$true] %s164
      %167 = dma.vmem_to_hbm [thread:$0]  %s165, 128, %s3, [#allocation4]
    $region21: #{tpu_custom_call.1} parent=1 // pred_fallthru
      _
    // Predicated region
    $region22: #{tpu_custom_call.1} parent=1 // pred_check
      _
    $region23: #{tpu_custom_call.1} parent=1 // pred_check_branch
      %169 = sbr.rel (0) target = $region25
    $region24: #{tpu_custom_call.1} parent=1 // pred_region
      %170 = dma.done [#allocation4], 128
    $region25: #{tpu_custom_call.1} parent=1 // pred_fallthru
      _
    %171 = vsyncpa [#allocation3], 1
    %172 = vsyncpa [#allocation4], 1

</llo_original>
